<compile_context>
chip_gen: v7x
topology: tpu7x:2x2x1
jax: 0.10.0
libtpu: 0.0.40
codegen_flags: <defaults>
</compile_context>

<pallas_src>
import functools

import jax
import jax.numpy as jnp
from jax.experimental import pallas as pl
from jax.experimental.pallas import tpu as pltpu


def _mlp_kernel(x_ref, w1_ref, b1_ref, w2_ref, b2_ref, w3_ref, b3_ref, out_ref):
    """Fused MLP forward for one batch tile. x streamed f32, weights bf16, out f32."""
    # In-kernel bf16 cast (VPU work, hides under the input DMA).
    x = x_ref[...].astype(jnp.bfloat16)  # (tb, input_size)

    # hidden_layer1 + ReLU (f32 accumulate, f32 elementwise)
    h1 = jnp.dot(x, w1_ref[...], preferred_element_type=jnp.float32) + b1_ref[...]
    h1 = jnp.maximum(h1, 0.0)

    # Dropout(0.5): inference/eval semantics -> identity.
    # TODO(synk): training-mode dropout (pltpu.prng_random_bits mask + 2x scale) not emitted.

    # hidden_layer2 + ReLU
    h2 = jnp.dot(h1.astype(jnp.bfloat16), w2_ref[...],
                 preferred_element_type=jnp.float32) + b2_ref[...]
    h2 = jnp.maximum(h2, 0.0)

    # out_layer + ReLU (logits kept at their natural classes_num width; no lane padding)
    o = jnp.dot(h2.astype(jnp.bfloat16), w3_ref[...],
                preferred_element_type=jnp.float32) + b3_ref[...]
    o = jnp.maximum(o, 0.0)

    # log_softmax over the class axis (exactly classes_num wide -> no mask needed)
    m = jnp.max(o, axis=1, keepdims=True)
    z = o - m
    lse = jnp.log(jnp.sum(jnp.exp(z), axis=1, keepdims=True))
    out_ref[...] = (z - lse).astype(out_ref.dtype)


@functools.partial(jax.jit, static_argnames=("input_size", "classes_num"))
def mlp_forward(x, prepared_params, input_size, classes_num):
    """x: any shape with total elements divisible by input_size (PyTorch reshape(-1, input_size)).
    prepared_params: output of prepare_params() (bf16 weights [in,out], f32 biases [1,out])."""
    w1, b1, w2, b2, w3, b3 = prepared_params
    x2d = x.reshape(-1, input_size)  # stays f32; cast to bf16 inside the kernel
    batch = x2d.shape[0]
    hidden1 = w1.shape[1]
    hidden2 = w2.shape[1]

    # Batch tiling: big tiles amortize the ~0.35 us per-step pipeline overhead, but keep
    # >= 2 grid steps so v7x's two TensorCores can both be used (dimension_semantics).
    if batch <= 8:
        tb = batch                                   # tiny batch: single full-extent block
    else:
        tb = max(8, min(4096, 8 * pl.cdiv(batch, 2 * 8)))  # multiple of 8, cap 4096 rows
    grid = (pl.cdiv(batch, tb),)

    # Weights/biases: constant index_map -> VMEM-resident across grid steps.
    def resident(a):
        return pl.BlockSpec(a.shape, lambda i: (0,) * a.ndim)

    flops = 2 * batch * (input_size * hidden1 + hidden1 * hidden2 + hidden2 * classes_num)
    transcendentals = batch * (classes_num + 1)  # exp per logit + log per row
    bytes_accessed = (
        batch * input_size * 4                         # x (f32 in)
        + batch * classes_num * 4                      # out (f32)
        + 2 * (w1.size + w2.size + w3.size)            # bf16 weights
        + 4 * (b1.size + b2.size + b3.size))           # f32 biases

    out = pl.pallas_call(
        _mlp_kernel,
        out_shape=jax.ShapeDtypeStruct((batch, classes_num), jnp.float32),
        grid=grid,
        in_specs=[
            pl.BlockSpec((tb, input_size), lambda i: (i, 0)),
            resident(w1), resident(b1),
            resident(w2), resident(b2),
            resident(w3), resident(b3),
        ],
        out_specs=pl.BlockSpec((tb, classes_num), lambda i: (i, 0)),
        compiler_params=pltpu.CompilerParams(
            dimension_semantics=("parallel",)),  # shard batch tiles across TCs on v7x
        cost_estimate=pl.CostEstimate(
            flops=flops, transcendentals=transcendentals, bytes_accessed=bytes_accessed),
    )(x2d, w1, b1, w2, b2, w3, b3)

    return out


def prepare_params(params):
    """One-time weight prep (hoisted out of the jitted forward): bf16 MXU weights,
    f32 biases. Call once and reuse across forward calls."""
    w1, b1, w2, b2, w3, b3 = params
    return (w1.astype(jnp.bfloat16), b1.astype(jnp.float32),
            w2.astype(jnp.bfloat16), b2.astype(jnp.float32),
            w3.astype(jnp.bfloat16), b3.astype(jnp.float32))


def init_params(key, input_size, hidden1, hidden2, classes_num):
    """Deterministic init mimicking nn.Linear (uniform(-1/sqrt(fan_in), 1/sqrt(fan_in))).
    Weights stored already transposed as [in, out]; biases as [1, out]."""
    def linear(k, fan_in, fan_out):
        kw, kb = jax.random.split(k)
        bound = 1.0 / jnp.sqrt(fan_in)
        w = jax.random.uniform(kw, (fan_in, fan_out), jnp.float32, -bound, bound)
        b = jax.random.uniform(kb, (1, fan_out), jnp.float32, -bound, bound)
        return w, b

    k1, k2, k3 = jax.random.split(key, 3)
    w1, b1 = linear(k1, input_size, hidden1)
    w2, b2 = linear(k2, hidden1, hidden2)
    w3, b3 = linear(k3, hidden2, classes_num)
    return (w1, b1, w2, b2, w3, b3)


def reference_forward(x, params, input_size):
    """Pure-JAX reference with the same bf16-matmul / f32-accumulate numerics."""
    w1, b1, w2, b2, w3, b3 = params
    h = x.reshape(-1, input_size)
    h = jnp.maximum(jnp.dot(h.astype(jnp.bfloat16), w1.astype(jnp.bfloat16),
                            preferred_element_type=jnp.float32) + b1, 0.0)
    h = jnp.maximum(jnp.dot(h.astype(jnp.bfloat16), w2.astype(jnp.bfloat16),
                            preferred_element_type=jnp.float32) + b2, 0.0)
    o = jnp.maximum(jnp.dot(h.astype(jnp.bfloat16), w3.astype(jnp.bfloat16),
                            preferred_element_type=jnp.float32) + b3, 0.0)
    return jax.nn.log_softmax(o, axis=1)


if __name__ == "__main__":
    # config.getint('MLP', 'hidden1') / 'hidden2' chosen as synthetic small sizes.
    input_size = 32
    hidden1 = 64
    hidden2 = 32
    classes_num = 16

    key = jax.random.PRNGKey(0)
    kx, kx2, kp = jax.random.split(key, 3)
    params = init_params(kp, input_size, hidden1, hidden2, classes_num)
    prepared = prepare_params(params)  # one-time prep, reused across calls

    # Small example: (2, 4, 16) -> reshape(-1, 32) -> batch 4 (single grid step).
    x = jax.random.normal(kx, (2, 4, 16), dtype=jnp.float32)
    out = jax.block_until_ready(mlp_forward(x, prepared, input_size, classes_num))
    ref = reference_forward(x, params, input_size)
    assert out.shape == (4, classes_num)
    assert jnp.allclose(out, ref, atol=1e-3, rtol=1e-3), "mismatch vs reference (small)"

    # Larger batch to exercise batch tiling (grid > 1 with a ragged tail block).
    x_big = jax.random.normal(kx2, (1037, input_size), dtype=jnp.float32)
    out_big = jax.block_until_ready(mlp_forward(x_big, prepared, input_size, classes_num))
    ref_big = reference_forward(x_big, params, input_size)
    assert out_big.shape == (1037, classes_num)
    assert jnp.allclose(out_big, ref_big, atol=1e-3, rtol=1e-3), "mismatch vs reference (tiled)"

    print("KERNEL_OK")
</pallas_src>

<mosaic_0001>
module attributes {stable_mosaic.version = 11 : i64} {
  func.func @_mlp_kernel(%arg0: i32, %arg1: memref<4x32xf32, #tpu.memory_space<vmem>>, %arg2: memref<32x64xbf16, #tpu.memory_space<vmem>>, %arg3: memref<1x64xf32, #tpu.memory_space<vmem>>, %arg4: memref<64x32xbf16, #tpu.memory_space<vmem>>, %arg5: memref<1x32xf32, #tpu.memory_space<vmem>>, %arg6: memref<32x16xbf16, #tpu.memory_space<vmem>>, %arg7: memref<1x16xf32, #tpu.memory_space<vmem>>, %arg8: memref<4x16xf32, #tpu.memory_space<vmem>>) attributes {dimension_semantics = [#tpu.dimension_semantics<parallel>], iteration_bounds = array<i64: 1>, scalar_prefetch = 0 : i64, scratch_operands = 0 : i64, tpu.core_type = #tpu.core_type<tc>, window_params = [{transform_indices = @transform_0, window_bounds = array<i64: 4, 32>}, {pipeline_mode = #tpu.pipeline_mode<synchronous>, transform_indices = @transform_1, window_bounds = array<i64: 32, 64>}, {pipeline_mode = #tpu.pipeline_mode<synchronous>, transform_indices = @transform_2, window_bounds = array<i64: 1, 64>}, {pipeline_mode = #tpu.pipeline_mode<synchronous>, transform_indices = @transform_3, window_bounds = array<i64: 64, 32>}, {pipeline_mode = #tpu.pipeline_mode<synchronous>, transform_indices = @transform_4, window_bounds = array<i64: 1, 32>}, {pipeline_mode = #tpu.pipeline_mode<synchronous>, transform_indices = @transform_5, window_bounds = array<i64: 32, 16>}, {pipeline_mode = #tpu.pipeline_mode<synchronous>, transform_indices = @transform_6, window_bounds = array<i64: 1, 16>}, {transform_indices = @transform_7, window_bounds = array<i64: 4, 16>}]} {
    %c0 = arith.constant 0 : index
    %c0_0 = arith.constant 0 : index
    %0 = vector.load %arg1[%c0, %c0_0] : memref<4x32xf32, #tpu.memory_space<vmem>>, vector<4x32xf32>
    %1 = arith.truncf %0 : vector<4x32xf32> to vector<4x32xbf16>
    %c0_1 = arith.constant 0 : index
    %c0_2 = arith.constant 0 : index
    %2 = vector.load %arg2[%c0_1, %c0_2] : memref<32x64xbf16, #tpu.memory_space<vmem>>, vector<32x64xbf16>
    %cst = arith.constant dense<0.000000e+00> : vector<4x64xf32>
    %3 = tpu.matmul %1, %2, %cst {dimension_numbers = #tpu.dot_dimension_numbers<[1], [0], [0], [1], [0, 0, 1, 1], [], []>} : vector<4x32xbf16>, vector<32x64xbf16>, vector<4x64xf32> -> vector<4x64xf32>
    %c0_3 = arith.constant 0 : index
    %c0_4 = arith.constant 0 : index
    %4 = vector.load %arg3[%c0_3, %c0_4] : memref<1x64xf32, #tpu.memory_space<vmem>>, vector<1x64xf32>
    %5 = vector.broadcast %4 : vector<1x64xf32> to vector<4x64xf32>
    %6 = arith.addf %3, %5 : vector<4x64xf32>
    %cst_5 = arith.constant 0.000000e+00 : f32
    %7 = vector.broadcast %cst_5 : f32 to vector<4x64xf32>
    %8 = arith.maximumf %6, %7 : vector<4x64xf32>
    %9 = arith.truncf %8 : vector<4x64xf32> to vector<4x64xbf16>
    %c0_6 = arith.constant 0 : index
    %c0_7 = arith.constant 0 : index
    %10 = vector.load %arg4[%c0_6, %c0_7] : memref<64x32xbf16, #tpu.memory_space<vmem>>, vector<64x32xbf16>
    %cst_8 = arith.constant dense<0.000000e+00> : vector<4x32xf32>
    %11 = tpu.matmul %9, %10, %cst_8 {dimension_numbers = #tpu.dot_dimension_numbers<[1], [0], [0], [1], [0, 0, 1, 1], [], []>} : vector<4x64xbf16>, vector<64x32xbf16>, vector<4x32xf32> -> vector<4x32xf32>
    %c0_9 = arith.constant 0 : index
    %c0_10 = arith.constant 0 : index
    %12 = vector.load %arg5[%c0_9, %c0_10] : memref<1x32xf32, #tpu.memory_space<vmem>>, vector<1x32xf32>
    %13 = vector.broadcast %12 : vector<1x32xf32> to vector<4x32xf32>
    %14 = arith.addf %11, %13 : vector<4x32xf32>
    %cst_11 = arith.constant 0.000000e+00 : f32
    %15 = vector.broadcast %cst_11 : f32 to vector<4x32xf32>
    %16 = arith.maximumf %14, %15 : vector<4x32xf32>
    %17 = arith.truncf %16 : vector<4x32xf32> to vector<4x32xbf16>
    %c0_12 = arith.constant 0 : index
    %c0_13 = arith.constant 0 : index
    %18 = vector.load %arg6[%c0_12, %c0_13] : memref<32x16xbf16, #tpu.memory_space<vmem>>, vector<32x16xbf16>
    %cst_14 = arith.constant dense<0.000000e+00> : vector<4x16xf32>
    %19 = tpu.matmul %17, %18, %cst_14 {dimension_numbers = #tpu.dot_dimension_numbers<[1], [0], [0], [1], [0, 0, 1, 1], [], []>} : vector<4x32xbf16>, vector<32x16xbf16>, vector<4x16xf32> -> vector<4x16xf32>
    %c0_15 = arith.constant 0 : index
    %c0_16 = arith.constant 0 : index
    %20 = vector.load %arg7[%c0_15, %c0_16] : memref<1x16xf32, #tpu.memory_space<vmem>>, vector<1x16xf32>
    %21 = vector.broadcast %20 : vector<1x16xf32> to vector<4x16xf32>
    %22 = arith.addf %19, %21 : vector<4x16xf32>
    %cst_17 = arith.constant 0.000000e+00 : f32
    %23 = vector.broadcast %cst_17 : f32 to vector<4x16xf32>
    %24 = arith.maximumf %22, %23 : vector<4x16xf32>
    %cst_18 = arith.constant dense<0xFF800000> : vector<4xf32>
    %25 = vector.multi_reduction <maximumf>, %24, %cst_18 [1] : vector<4x16xf32> to vector<4xf32>
    %26 = vector.shape_cast %25 : vector<4xf32> to vector<4x1xf32>
    %27 = vector.broadcast %26 : vector<4x1xf32> to vector<4x16xf32>
    %28 = arith.subf %24, %27 : vector<4x16xf32>
    %29 = math.exp %28 : vector<4x16xf32>
    %cst_19 = arith.constant dense<0.000000e+00> : vector<4xf32>
    %30 = vector.multi_reduction <add>, %29, %cst_19 [1] : vector<4x16xf32> to vector<4xf32>
    %31 = vector.shape_cast %30 : vector<4xf32> to vector<4x1xf32>
    %32 = math.log %31 : vector<4x1xf32>
    %33 = vector.broadcast %32 : vector<4x1xf32> to vector<4x16xf32>
    %34 = arith.subf %28, %33 : vector<4x16xf32>
    %c0_20 = arith.constant 0 : index
    %c0_21 = arith.constant 0 : index
    %35 = vector.load %arg8[%c0_20, %c0_21] : memref<4x16xf32, #tpu.memory_space<vmem>>, vector<4x16xf32>
    tpu.vector_store %arg8[%c0_20, %c0_21], %34 {strides = array<i32>} : memref<4x16xf32, #tpu.memory_space<vmem>>, vector<4x16xf32>,
    return
  }
  func.func @transform_0(%arg0: i32) -> (i32, i32) {
    %c0_i32 = arith.constant 0 : i32
    %c0_i32_0 = arith.constant 0 : i32
    return %arg0, %c0_i32 : i32, i32
  }
  func.func @transform_1(%arg0: i32) -> (i32, i32) {
    %c0_i32 = arith.constant 0 : i32
    %c0_i32_0 = arith.constant 0 : i32
    %c0_i32_1 = arith.constant 0 : i32
    return %c0_i32, %c0_i32_0 : i32, i32
  }
  func.func @transform_2(%arg0: i32) -> (i32, i32) {
    %c0_i32 = arith.constant 0 : i32
    %c0_i32_0 = arith.constant 0 : i32
    %c0_i32_1 = arith.constant 0 : i32
    return %c0_i32, %c0_i32_0 : i32, i32
  }
  func.func @transform_3(%arg0: i32) -> (i32, i32) {
    %c0_i32 = arith.constant 0 : i32
    %c0_i32_0 = arith.constant 0 : i32
    %c0_i32_1 = arith.constant 0 : i32
    return %c0_i32, %c0_i32_0 : i32, i32
  }
  func.func @transform_4(%arg0: i32) -> (i32, i32) {
    %c0_i32 = arith.constant 0 : i32
    %c0_i32_0 = arith.constant 0 : i32
    %c0_i32_1 = arith.constant 0 : i32
    return %c0_i32, %c0_i32_0 : i32, i32
  }
  func.func @transform_5(%arg0: i32) -> (i32, i32) {
    %c0_i32 = arith.constant 0 : i32
    %c0_i32_0 = arith.constant 0 : i32
    %c0_i32_1 = arith.constant 0 : i32
    return %c0_i32, %c0_i32_0 : i32, i32
  }
  func.func @transform_6(%arg0: i32) -> (i32, i32) {
    %c0_i32 = arith.constant 0 : i32
    %c0_i32_0 = arith.constant 0 : i32
    %c0_i32_1 = arith.constant 0 : i32
    return %c0_i32, %c0_i32_0 : i32, i32
  }
  func.func @transform_7(%arg0: i32) -> (i32, i32) {
    %c0_i32 = arith.constant 0 : i32
    %c0_i32_0 = arith.constant 0 : i32
    return %arg0, %c0_i32 : i32, i32
  }
}

</mosaic_0001>

<llo_original>
// kernel: mlp_forward.1
$region0: #{mlp_forward.1}
  #allocation0 [shape = 'u32[]', space=smem, size = 0x4, offset = 0x4, fixed_abs, tag = 'smem constant byte address 0x4 - core index']
  #allocation1 [shape = 'u32[144,128]{1,0:T(1,128)}', space=vmem, size = 0x12000, scoped, tag = 'internal scratch']
  %s0 = inlined_call_operand.vmem [shape: f32[4,32], index: 0, kind: input, shape index: {}]
  %s1 = inlined_call_operand.vmem [shape: bf16[32,64], index: 1, kind: input, shape index: {}]
  %s2 = inlined_call_operand.vmem [shape: f32[1,64], index: 2, kind: input, shape index: {}]
  %s3 = inlined_call_operand.vmem [shape: bf16[64,32], index: 3, kind: input, shape index: {}]
  %s4 = inlined_call_operand.vmem [shape: f32[1,32], index: 4, kind: input, shape index: {}]
  %s5 = inlined_call_operand.vmem [shape: bf16[32,16], index: 5, kind: input, shape index: {}]
  %s6 = inlined_call_operand.vmem [shape: f32[1,16], index: 6, kind: input, shape index: {}]
  %s7 = inlined_call_operand.hbm [shape: f32[4,16], index: 7, kind: output, shape index: {}]
  %s8 = sld [smem:[#allocation0]]
  $region38: #{mlp_forward.1} parent=0
    _
  %s10 = ssub.s32 1, %s8
  %s11 = scalar_select 0, %s10, %s8
  $region1: #{mlp_forward.1} parent=0
    #allocation2 [shape = 'u8[2048]{0}', space=vmem, size = 0x800, scoped, tag = 'output window, operand 0, single buffered']
    #allocation3 [shape = 's32[1]{0}', space=sflag, size = 0x4, scoped, tag = 'scoped memory for mlp_forward.1']
    %12 = vsyncpa [#allocation3], 0
    // Predicated region
    $region2: #{mlp_forward.1} parent=1 // pred_check
      _
    $region3: #{mlp_forward.1} parent=1 // pred_check_branch
      %14 = sbr.rel (0) target = $region5
    $region4: #{mlp_forward.1} parent=1 // pred_region
      _
    $region5: #{mlp_forward.1} parent=1 // pred_fallthru
      _
    // Predicated region
    $region6: #{mlp_forward.1} parent=1 // pred_check
      _
    $region7: #{mlp_forward.1} parent=1 // pred_check_branch
      %16 = sbr.rel (0) target = $region9
    $region8: #{mlp_forward.1} parent=1 // pred_region
      _
    $region9: #{mlp_forward.1} parent=1 // pred_fallthru
      _
    // Predicated region
    $region10: #{mlp_forward.1} parent=1 // pred_check
      _
    $region11: #{mlp_forward.1} parent=1 // pred_check_branch
      %18 = sbr.rel (0) target = $region13
    $region12: #{mlp_forward.1} parent=1 // pred_region
      _
    $region13: #{mlp_forward.1} parent=1 // pred_fallthru
      _
    // Predicated region
    $region14: #{mlp_forward.1} parent=1 // pred_check
      _
    $region15: #{mlp_forward.1} parent=1 // pred_check_branch
      %20 = sbr.rel (0) target = $region17
    $region16: #{mlp_forward.1} parent=1 // pred_region
      _
    $region17: #{mlp_forward.1} parent=1 // pred_fallthru
      _
    // Predicated region
    $region18: #{mlp_forward.1} parent=1 // pred_check
      _
    $region19: #{mlp_forward.1} parent=1 // pred_check_branch
      %22 = sbr.rel (0) target = $region21
    $region20: #{mlp_forward.1} parent=1 // pred_region
      _
    $region21: #{mlp_forward.1} parent=1 // pred_fallthru
      _
    // Predicated region
    $region22: #{mlp_forward.1} parent=1 // pred_check
      _
    $region23: #{mlp_forward.1} parent=1 // pred_check_branch
      %24 = sbr.rel (0) target = $region25
    $region24: #{mlp_forward.1} parent=1 // pred_region
      _
    $region25: #{mlp_forward.1} parent=1 // pred_fallthru
      _
    // Predicated region
    $region26: #{mlp_forward.1} parent=1 // pred_check
      _
    $region27: #{mlp_forward.1} parent=1 // pred_check_branch
      %26 = sbr.rel (0) target = $region29
    $region28: #{mlp_forward.1} parent=1 // pred_region
      _
    $region29: #{mlp_forward.1} parent=1 // pred_fallthru
      _
    %v28 = vld [vmem:[%s0] sm:$0xf]
    %v29 = vpack.c.bf16 %v28, %v28
    %v30 = vld [vmem:[%s1] sm:$0xf]
    %v31 = vld [vmem:[%s1 + $0x4] sm:$0xf]
    %v32 = vld [vmem:[%s1 + $0x8] sm:$0xf]
    %v33 = vld [vmem:[%s1 + $0xc] sm:$0xf]
    %v34 = vld [vmem:[%s2] sm:$0x1]
    %v36 = vlaneseq
    %v37 = vshrl.u32 %v36, 7
    %v38 = vsub.s32 0, %v37
    %v39 = vrot.slane %v34, %v38
    %v45 = vunpack.c.l.b16 %v30
    %v46 = vunpack.c.l.b16 %v31
    %v47 = vunpack.c.l.b16 %v32
    %v48 = vunpack.c.l.b16 %v33
    %v49 = vpack.c.b16 %v46, %v45
    %v50 = vpack.c.b16 %v48, %v47
    %vm53 = vcmask 261120
    %v55 = vsel %vm53, %v29, 0
    %57 = vmatprep.subr.bf16.mxu0 0
    %58 = vmatpush1.bf16.msra.mxu0 %v49
    %59 = vmatprep.subr.bf16.mxu0 0
    %60 = vmatpush1.bf16.msra.mxu0 %v50
    %61 = vmatprep.subr.bf16.mxu0 0
    %62 = vmatpush1.bf16.msra.mxu0 0
    %63 = vmatprep.subr.bf16.mxu0 0
    %64 = vmatpush1.bf16.msra.mxu0 0
    %65 = vmatprep.subr.bf16.mxu0 0
    %66 = vmatpush1.bf16.msra.mxu0 0
    %67 = vmatprep.subr.bf16.mxu0 0
    %68 = vmatpush1.bf16.msra.mxu0 0
    %69 = vmatprep.subr.bf16.mxu0 0
    %70 = vmatpush1.bf16.msra.mxu0 0
    %71 = vmatprep.subr.bf16.mxu0 0
    %72 = vmatpush1.bf16.msra.mxu0 0
    %73 = vmatprep.subr.bf16.mxu0 0
    %74 = vmatpush1.bf16.msra.mxu0 0
    %75 = vmatprep.subr.bf16.mxu0 0
    %76 = vmatpush1.bf16.msra.mxu0 0
    %77 = vmatprep.subr.bf16.mxu0 0
    %78 = vmatpush1.bf16.msra.mxu0 0
    %79 = vmatprep.subr.bf16.mxu0 0
    %80 = vmatpush1.bf16.msra.mxu0 0
    %81 = vmatprep.subr.bf16.mxu0 0
    %82 = vmatpush1.bf16.msra.mxu0 0
    %83 = vmatprep.subr.bf16.mxu0 0
    %84 = vmatpush1.bf16.msra.mxu0 0
    %85 = vmatprep.subr.bf16.mxu0 0
    %86 = vmatpush1.bf16.msra.mxu0 0
    %87 = vmatprep.subr.bf16.mxu0 0
    %88 = vmatpush1.bf16.msra.mxu0 0
    %89 = vmatprep.mubr.bf16.mxu0 0
    %90 = vmatmul.mubr.bf16.gmra.mrb[0].mxu0 %v55
    %v91 = vpop.f32.mrb[0].mxu0
    %v92 = vadd.f32 %v39, %v91
    %v93 = vpop.f32.mrb[0].mxu0
    %v94 = vpop.f32.mrb[0].mxu0
    %v95 = vpop.f32.mrb[0].mxu0
    %96 = vdwg.mxu0
    %v97 = vmax.f32 %v92, 0.0
    %v98 = vpack.c.bf16 %v97, %v97
    %v99 = vld [vmem:[%s3] sm:$0xf]
    %v100 = vld [vmem:[%s3 + $0x4] sm:$0xf]
    %v101 = vld [vmem:[%s3 + $0x8] sm:$0xf]
    %v102 = vld [vmem:[%s3 + $0xc] sm:$0xf]
    %v103 = vld [vmem:[%s3 + $0x10] sm:$0xf]
    %v104 = vld [vmem:[%s3 + $0x14] sm:$0xf]
    %v105 = vld [vmem:[%s3 + $0x18] sm:$0xf]
    %v106 = vld [vmem:[%s3 + $0x1c] sm:$0xf]
    %v107 = vld [vmem:[%s4] sm:$0x1]
    %v109 = vlaneseq
    %v110 = vshrl.u32 %v109, 7
    %v111 = vsub.s32 0, %v110
    %v112 = vrot.slane %v107, %v111
    %v122 = vunpack.c.l.b16 %v99
    %v123 = vunpack.c.l.b16 %v100
    %v124 = vunpack.c.l.b16 %v101
    %v125 = vunpack.c.l.b16 %v102
    %v126 = vunpack.c.l.b16 %v103
    %v127 = vunpack.c.l.b16 %v104
    %v128 = vunpack.c.l.b16 %v105
    %v129 = vunpack.c.l.b16 %v106
    %v130 = vpack.c.b16 %v123, %v122
    %v131 = vpack.c.b16 %v125, %v124
    %v132 = vpack.c.b16 %v127, %v126
    %v133 = vpack.c.b16 %v129, %v128
    %vm138 = vcmask 523264
    %v140 = vsel %vm138, %v98, 0
    %142 = vmatprep.subr.bf16.mxu0 0
    %143 = vmatpush1.bf16.msra.mxu0 %v130
    %144 = vmatprep.subr.bf16.mxu0 0
    %145 = vmatpush1.bf16.msra.mxu0 %v131
    %146 = vmatprep.subr.bf16.mxu0 0
    %147 = vmatpush1.bf16.msra.mxu0 %v132
    %148 = vmatprep.subr.bf16.mxu0 0
    %149 = vmatpush1.bf16.msra.mxu0 %v133
    %150 = vmatprep.subr.bf16.mxu0 0
    %151 = vmatpush1.bf16.msra.mxu0 0
    %152 = vmatprep.subr.bf16.mxu0 0
    %153 = vmatpush1.bf16.msra.mxu0 0
    %154 = vmatprep.subr.bf16.mxu0 0
    %155 = vmatpush1.bf16.msra.mxu0 0
    %156 = vmatprep.subr.bf16.mxu0 0
    %157 = vmatpush1.bf16.msra.mxu0 0
    %158 = vmatprep.subr.bf16.mxu0 0
    %159 = vmatpush1.bf16.msra.mxu0 0
    %160 = vmatprep.subr.bf16.mxu0 0
    %161 = vmatpush1.bf16.msra.mxu0 0
    %162 = vmatprep.subr.bf16.mxu0 0
    %163 = vmatpush1.bf16.msra.mxu0 0
    %164 = vmatprep.subr.bf16.mxu0 0
    %165 = vmatpush1.bf16.msra.mxu0 0
    %166 = vmatprep.subr.bf16.mxu0 0
    %167 = vmatpush1.bf16.msra.mxu0 0
    %168 = vmatprep.subr.bf16.mxu0 0
    %169 = vmatpush1.bf16.msra.mxu0 0
    %170 = vmatprep.subr.bf16.mxu0 0
    %171 = vmatpush1.bf16.msra.mxu0 0
    %172 = vmatprep.subr.bf16.mxu0 0
    %173 = vmatpush1.bf16.msra.mxu0 0
    %174 = vmatprep.mubr.bf16.mxu0 0
    %175 = vmatmul.mubr.bf16.gmra.mrb[0].mxu0 %v140
    %v176 = vpop.f32.mrb[0].mxu0
    %v177 = vadd.f32 %v112, %v176
    %v178 = vpop.f32.mrb[0].mxu0
    %v179 = vpop.f32.mrb[0].mxu0
    %v180 = vpop.f32.mrb[0].mxu0
    %181 = vdwg.mxu0
    %v182 = vmax.f32 %v177, 0.0
    %v183 = vpack.c.bf16 %v182, %v182
    %v184 = vld [vmem:[%s5] sm:$0xf]
    %v185 = vld [vmem:[%s5 + $0x4] sm:$0xf]
    %v186 = vld [vmem:[%s5 + $0x8] sm:$0xf]
    %v187 = vld [vmem:[%s5 + $0xc] sm:$0xf]
    %v188 = vld [vmem:[%s6] sm:$0x1]
    %v190 = vlaneseq
    %v191 = vshrl.u32 %v190, 7
    %v192 = vsub.s32 0, %v191
    %v193 = vrot.slane %v188, %v192
    %v199 = vunpack.c.l.b16 %v184
    %v200 = vunpack.c.l.b16 %v185
    %v201 = vunpack.c.l.b16 %v186
    %v202 = vunpack.c.l.b16 %v187
    %v203 = vpack.c.b16 %v200, %v199
    %v204 = vpack.c.b16 %v202, %v201
    %v208 = vsel %vm53, %v183, 0
    %210 = vmatprep.subr.bf16.mxu0 0
    %211 = vmatpush1.bf16.msra.mxu0 %v203
    %212 = vmatprep.subr.bf16.mxu0 0
    %213 = vmatpush1.bf16.msra.mxu0 %v204
    %214 = vmatprep.subr.bf16.mxu0 0
    %215 = vmatpush1.bf16.msra.mxu0 0
    %216 = vmatprep.subr.bf16.mxu0 0
    %217 = vmatpush1.bf16.msra.mxu0 0
    %218 = vmatprep.subr.bf16.mxu0 0
    %219 = vmatpush1.bf16.msra.mxu0 0
    %220 = vmatprep.subr.bf16.mxu0 0
    %221 = vmatpush1.bf16.msra.mxu0 0
    %222 = vmatprep.subr.bf16.mxu0 0
    %223 = vmatpush1.bf16.msra.mxu0 0
    %224 = vmatprep.subr.bf16.mxu0 0
    %225 = vmatpush1.bf16.msra.mxu0 0
    %226 = vmatprep.subr.bf16.mxu0 0
    %227 = vmatpush1.bf16.msra.mxu0 0
    %228 = vmatprep.subr.bf16.mxu0 0
    %229 = vmatpush1.bf16.msra.mxu0 0
    %230 = vmatprep.subr.bf16.mxu0 0
    %231 = vmatpush1.bf16.msra.mxu0 0
    %232 = vmatprep.subr.bf16.mxu0 0
    %233 = vmatpush1.bf16.msra.mxu0 0
    %234 = vmatprep.subr.bf16.mxu0 0
    %235 = vmatpush1.bf16.msra.mxu0 0
    %236 = vmatprep.subr.bf16.mxu0 0
    %237 = vmatpush1.bf16.msra.mxu0 0
    %238 = vmatprep.subr.bf16.mxu0 0
    %239 = vmatpush1.bf16.msra.mxu0 0
    %240 = vmatprep.subr.bf16.mxu0 0
    %241 = vmatpush1.bf16.msra.mxu0 0
    %242 = vmatprep.mubr.bf16.mxu0 0
    %243 = vmatmul.mubr.bf16.gmra.mrb[0].mxu0 %v208
    %v244 = vpop.f32.mrb[0].mxu0
    %v245 = vadd.f32 %v193, %v244
    %v246 = vpop.f32.mrb[0].mxu0
    %v247 = vpop.f32.mrb[0].mxu0
    %v248 = vpop.f32.mrb[0].mxu0
    %249 = vdwg.mxu0
    %v250 = vmax.f32 %v245, 0.0
    %vm251 = vcmask 125952
    %v252 = vsel %vm251, %v250, -inf
    %253 = vmax.xlane.f32.xlu0 %v252
    %v254 = vpop.xlane.xlu0 %253
    %v255 = vsub.f32 %v250, %v254
    %v256 = vmul.f32 %v255, 1.442695
    %v257 = vpow.pop %v256
    %v258 = vsel %vm251, %v257, 0.0
    %259 = vadd.xlane.f32.xlu0 %v258
    %v260 = vpop.xlane.xlu0 %259
    %v261 = vlog2.pop %v260
    %v262 = vmul.f32 %v261, 0.6931472
    %v263 = vsub.f32 %v255, %v262
    %264 = vst.msk [vmem:[#allocation2] sm:$0xf] %vm251, %v263
    // Predicated region
    $region30: #{mlp_forward.1} parent=1 // pred_check
      _
    $region31: #{mlp_forward.1} parent=1 // pred_check_branch
      %266 = sbr.rel (0) target = $region33
    $region32: #{mlp_forward.1} parent=1 // pred_region
      %s268 = ssub.s32 64, 64
      %269 = vsyncadd [#allocation3], %s268
      %s271 = sshll.u32 [#allocation2], 4
      %s272 = int_to_ptr.vmem [resolvable:$true] %s271
      %274 = dma.vmem_to_hbm [thread:$0]  %s272, 64, %s7, [#allocation3]
    $region33: #{mlp_forward.1} parent=1 // pred_fallthru
      _
    // Predicated region
    $region34: #{mlp_forward.1} parent=1 // pred_check
      _
    $region35: #{mlp_forward.1} parent=1 // pred_check_branch
      %276 = sbr.rel (0) target = $region37
    $region36: #{mlp_forward.1} parent=1 // pred_region
      %277 = dma.done [#allocation3], 64
    $region37: #{mlp_forward.1} parent=1 // pred_fallthru
      _
    %278 = vsyncpa [#allocation3], 1

</llo_original>
